<compile_context>
chip_gen: v5e
topology: v5e:2x2
jax: 0.10.0
libtpu: 0.0.40
codegen_flags: <defaults>
</compile_context>

<pallas_src>
import jax
import jax.numpy as jnp
from jax.experimental import pallas as pl
from jax.experimental.pallas import tpu as pltpu

# DualSMC_LightDark_Params clamp constants (standard SAC values).
LOG_SIG_MIN = -20.0
LOG_SIG_MAX = 2.0

LANE = 128          # vreg lane width
BATCH_ALIGN = 16    # bf16 sublane packing: 16 rows per vreg


def _round_up(x, m):
    return ((x + m - 1) // m) * m


def _make_kernel(num_actions):
    """Kernel closure; num_actions is a static Python int for the clamp mask."""

    def kernel(s_ref, w1_ref, w2_ref, wh_ref, b_ref, out_ref):
        h_pad = w1_ref.shape[1]       # padded hidden width (multiple of 128)
        head_pad = wh_ref.shape[1]    # padded fused-head width (multiple of 128)

        x = s_ref[...]                                   # (TB, num_inputs) bf16
        b1 = b_ref[0:1, :h_pad]                          # f32 biases
        b2 = b_ref[1:2, :h_pad]
        bh = b_ref[2:3, :head_pad]

        # bf16 x bf16 -> f32 accumulation (fast MXU path on v5e/v6e/v7x);
        # bias add / relu / clamp are done in f32.
        h1 = jnp.dot(x, w1_ref[...], preferred_element_type=jnp.float32) + b1
        h1 = jnp.maximum(h1, 0.0)                        # relu (f32)

        h2 = jnp.dot(h1.astype(jnp.bfloat16), w2_ref[...],
                     preferred_element_type=jnp.float32) + b2
        h2 = jnp.maximum(h2, 0.0)                        # relu (f32)

        # Fused head: cols [0, A) = mean, cols [A, 2A) = log_std, rest = pad.
        head = jnp.dot(h2.astype(jnp.bfloat16), wh_ref[...],
                       preferred_element_type=jnp.float32) + bh

        lane = jax.lax.broadcasted_iota(jnp.int32, head.shape, 1)
        is_log_std = (lane >= num_actions) & (lane < 2 * num_actions)
        clipped = jnp.clip(head, LOG_SIG_MIN, LOG_SIG_MAX)
        out_ref[...] = jnp.where(is_log_std, clipped, head).astype(out_ref.dtype)

    return kernel


def prepare_params(params, *, weight_dtype=jnp.bfloat16):
    """One-time parameter preparation (done at init, NOT per forward call):
    pad hidden / head widths to 128 lanes, fuse mean+log_std heads into one
    (hidden, 2A)->128 matrix, merge the four biases into one (3, 128) array,
    and cast the weights to bf16 (f32 accumulation happens in the kernel)."""
    w1, b1, w2, b2, wm, bm, ws, bs = params
    num_inputs, hidden = w1.shape
    num_actions = wm.shape[1]

    h_pad = max(_round_up(hidden, LANE), LANE)
    head_pad = max(_round_up(2 * num_actions, LANE), LANE)
    bias_w = max(h_pad, head_pad)

    f32 = jnp.float32
    w1_p = (jnp.zeros((num_inputs, h_pad), f32)
            .at[:, :hidden].set(w1)).astype(weight_dtype)
    w2_p = (jnp.zeros((h_pad, h_pad), f32)
            .at[:hidden, :hidden].set(w2)).astype(weight_dtype)
    wh_p = (jnp.zeros((h_pad, head_pad), f32)
            .at[:hidden, :num_actions].set(wm)
            .at[:hidden, num_actions:2 * num_actions].set(ws)).astype(weight_dtype)
    b_p = (jnp.zeros((3, bias_w), f32)
           .at[0, :hidden].set(b1.reshape(-1))
           .at[1, :hidden].set(b2.reshape(-1))
           .at[2, :num_actions].set(bm.reshape(-1))
           .at[2, num_actions:2 * num_actions].set(bs.reshape(-1)))

    meta = dict(num_inputs=num_inputs, hidden=hidden, num_actions=num_actions,
                h_pad=h_pad, head_pad=head_pad)
    return dict(w1=w1_p, w2=w2_p, wh=wh_p, b=b_p, meta=meta)


def _choose_tile_b(B, max_tile_b):
    # Aim for >= 2 tiles whenever B > BATCH_ALIGN so the "parallel" batch axis
    # can shard across v7x's two TensorCores; otherwise one tile.  Large tiles
    # (up to max_tile_b rows) amortize per-grid-step pipeline overhead.
    tile = _round_up(max(1, (B + 1) // 2), BATCH_ALIGN)
    return max(BATCH_ALIGN, min(max_tile_b, tile))


def gaussian_policy_forward(state, prepared, *, max_tile_b=2048):
    """state: (B, num_inputs) f32.  prepared: output of prepare_params().
    Returns (mean, log_std), each (B, num_actions) f32."""
    meta = prepared["meta"]
    num_inputs = meta["num_inputs"]
    num_actions = meta["num_actions"]
    h_pad = meta["h_pad"]
    head_pad = meta["head_pad"]
    bias_w = prepared["b"].shape[1]

    B = state.shape[0]
    assert state.shape[1] == num_inputs

    tile_b = _choose_tile_b(B, max_tile_b)
    grid = (pl.cdiv(B, tile_b),)   # edge tile handled by Pallas masking

    # bf16 state tile: halves state DMA bytes and matches the weight dtype so
    # the MXU runs the fast bf16 path (accumulation stays f32 in-kernel).
    x = state.astype(prepared["w1"].dtype)

    def param_spec(shape):
        # Parameters have a constant index map (resident across all grid
        # steps); single-buffer them so no double-buffer VMEM is reserved.
        return pl.BlockSpec(shape, lambda i: (0, 0),
                            pipeline_mode=pl.Buffered(1))

    out = pl.pallas_call(
        _make_kernel(num_actions),
        out_shape=jax.ShapeDtypeStruct((B, head_pad), jnp.float32),
        grid_spec=pltpu.PrefetchScalarGridSpec(
            num_scalar_prefetch=0,
            grid=grid,
            in_specs=[
                pl.BlockSpec((tile_b, num_inputs), lambda i: (i, 0)),  # state tile
                param_spec((num_inputs, h_pad)),                        # W1
                param_spec((h_pad, h_pad)),                             # W2
                param_spec((h_pad, head_pad)),                          # fused head W
                param_spec((3, bias_w)),                                # merged biases
            ],
            out_specs=pl.BlockSpec((tile_b, head_pad), lambda i: (i, 0)),
        ),
        compiler_params=pltpu.CompilerParams(
            dimension_semantics=("parallel",)),
    )(x, prepared["w1"], prepared["w2"], prepared["wh"], prepared["b"])

    # Single slice of the lane-dense slab, then split mean / log_std.
    mh = out[:, :2 * num_actions]
    return mh[:, :num_actions], mh[:, num_actions:]


def init_params(key, num_inputs, num_actions, hidden_dim):
    """Deterministic xavier-uniform-like init (weights_init_: xavier weights,
    zero bias).  Weights returned already transposed to (in, out)."""
    ks = jax.random.split(key, 4)

    def xavier(k, fan_in, fan_out):
        bound = jnp.sqrt(6.0 / (fan_in + fan_out))
        return jax.random.uniform(k, (fan_in, fan_out), jnp.float32, -bound, bound)

    w1 = xavier(ks[0], num_inputs, hidden_dim)
    b1 = jnp.zeros((1, hidden_dim), jnp.float32)
    w2 = xavier(ks[1], hidden_dim, hidden_dim)
    b2 = jnp.zeros((1, hidden_dim), jnp.float32)
    wm = xavier(ks[2], hidden_dim, num_actions)
    bm = jnp.zeros((1, num_actions), jnp.float32)
    ws = xavier(ks[3], hidden_dim, num_actions)
    bs = jnp.zeros((1, num_actions), jnp.float32)
    return (w1, b1, w2, b2, wm, bm, ws, bs)


def reference_forward(state, params):
    w1, b1, w2, b2, wm, bm, ws, bs = params
    x = jnp.maximum(state @ w1 + b1, 0.0)
    x = jnp.maximum(x @ w2 + b2, 0.0)
    mean = x @ wm + bm
    log_std = jnp.clip(x @ ws + bs, LOG_SIG_MIN, LOG_SIG_MAX)
    return mean, log_std


if __name__ == "__main__":
    # Small shapes consistent with the module: state = cat(mean_state, par_states)
    batch = 16
    num_inputs = 32     # e.g. dim_state * (1 + num_par) concatenation width
    hidden_dim = 64
    num_actions = 2

    key = jax.random.PRNGKey(0)
    k_state, k_params = jax.random.split(key)
    state = jax.random.normal(k_state, (batch, num_inputs), jnp.float32)
    params = init_params(k_params, num_inputs, num_actions, hidden_dim)

    # One-time parameter preparation (padding / fusion / bf16 cast).
    prepared = prepare_params(params)

    mean, log_std = gaussian_policy_forward(state, prepared)
    jax.block_until_ready((mean, log_std))

    # Correctness check vs. a pure-JAX f32 reference (bf16 weights -> relaxed tol).
    mean_ref, log_std_ref = reference_forward(state, params)
    assert mean.shape == (batch, num_actions)
    assert log_std.shape == (batch, num_actions)
    assert jnp.allclose(mean, mean_ref, atol=5e-2, rtol=5e-2)
    assert jnp.allclose(log_std, log_std_ref, atol=5e-2, rtol=5e-2)

    # Non-divisible batch exercises the cdiv grid edge tile (masked stores).
    state_odd = jax.random.normal(k_state, (batch + 3, num_inputs), jnp.float32)
    mean_o, logstd_o = gaussian_policy_forward(state_odd, prepared)
    jax.block_until_ready((mean_o, logstd_o))
    mean_o_ref, logstd_o_ref = reference_forward(state_odd, params)
    assert mean_o.shape == (batch + 3, num_actions)
    assert jnp.allclose(mean_o, mean_o_ref, atol=5e-2, rtol=5e-2)
    assert jnp.allclose(logstd_o, logstd_o_ref, atol=5e-2, rtol=5e-2)

    # TODO(synk): sample()/get_action() use Normal.rsample / tanh-squash log-prob;
    # only the deterministic forward() hot path is implemented in the kernel.
    print("KERNEL_OK")
</pallas_src>

<mosaic_0001>
module attributes {stable_mosaic.version = 11 : i64} {
  func.func @kernel(%arg0: i32, %arg1: memref<16x32xbf16, #tpu.memory_space<vmem>>, %arg2: memref<32x128xbf16, #tpu.memory_space<vmem>>, %arg3: memref<128x128xbf16, #tpu.memory_space<vmem>>, %arg4: memref<128x128xbf16, #tpu.memory_space<vmem>>, %arg5: memref<3x128xf32, #tpu.memory_space<vmem>>, %arg6: memref<16x128xf32, #tpu.memory_space<vmem>>) attributes {dimension_semantics = [#tpu.dimension_semantics<parallel>], iteration_bounds = array<i64: 1>, scalar_prefetch = 0 : i64, scratch_operands = 0 : i64, tpu.core_type = #tpu.core_type<tc>, window_params = [{transform_indices = @transform_0, window_bounds = array<i64: 16, 32>}, {pipeline_mode = #tpu.pipeline_mode<synchronous>, transform_indices = @transform_1, window_bounds = array<i64: 32, 128>}, {pipeline_mode = #tpu.pipeline_mode<synchronous>, transform_indices = @transform_2, window_bounds = array<i64: 128, 128>}, {pipeline_mode = #tpu.pipeline_mode<synchronous>, transform_indices = @transform_3, window_bounds = array<i64: 128, 128>}, {pipeline_mode = #tpu.pipeline_mode<synchronous>, transform_indices = @transform_4, window_bounds = array<i64: 3, 128>}, {transform_indices = @transform_5, window_bounds = array<i64: 16, 128>}]} {
    %c0 = arith.constant 0 : index
    %c0_0 = arith.constant 0 : index
    %0 = vector.load %arg1[%c0, %c0_0] : memref<16x32xbf16, #tpu.memory_space<vmem>>, vector<16x32xbf16>
    %c0_1 = arith.constant 0 : index
    %c0_2 = arith.constant 0 : index
    %1 = vector.load %arg5[%c0_1, %c0_2] : memref<3x128xf32, #tpu.memory_space<vmem>>, vector<1x128xf32>
    %c1 = arith.constant 1 : index
    %c0_3 = arith.constant 0 : index
    %2 = vector.load %arg5[%c1, %c0_3] : memref<3x128xf32, #tpu.memory_space<vmem>>, vector<1x128xf32>
    %c2 = arith.constant 2 : index
    %c0_4 = arith.constant 0 : index
    %3 = vector.load %arg5[%c2, %c0_4] : memref<3x128xf32, #tpu.memory_space<vmem>>, vector<1x128xf32>
    %c0_5 = arith.constant 0 : index
    %c0_6 = arith.constant 0 : index
    %4 = vector.load %arg2[%c0_5, %c0_6] : memref<32x128xbf16, #tpu.memory_space<vmem>>, vector<32x128xbf16>
    %cst = arith.constant dense<0.000000e+00> : vector<16x128xf32>
    %5 = tpu.matmul %0, %4, %cst {dimension_numbers = #tpu.dot_dimension_numbers<[1], [0], [0], [1], [0, 0, 1, 1], [], []>} : vector<16x32xbf16>, vector<32x128xbf16>, vector<16x128xf32> -> vector<16x128xf32>
    %6 = vector.broadcast %1 : vector<1x128xf32> to vector<16x128xf32>
    %7 = arith.addf %5, %6 : vector<16x128xf32>
    %cst_7 = arith.constant 0.000000e+00 : f32
    %8 = vector.broadcast %cst_7 : f32 to vector<16x128xf32>
    %9 = arith.maximumf %7, %8 : vector<16x128xf32>
    %10 = arith.truncf %9 : vector<16x128xf32> to vector<16x128xbf16>
    %c0_8 = arith.constant 0 : index
    %c0_9 = arith.constant 0 : index
    %11 = vector.load %arg3[%c0_8, %c0_9] : memref<128x128xbf16, #tpu.memory_space<vmem>>, vector<128x128xbf16>
    %cst_10 = arith.constant dense<0.000000e+00> : vector<16x128xf32>
    %12 = tpu.matmul %10, %11, %cst_10 {dimension_numbers = #tpu.dot_dimension_numbers<[1], [0], [0], [1], [0, 0, 1, 1], [], []>} : vector<16x128xbf16>, vector<128x128xbf16>, vector<16x128xf32> -> vector<16x128xf32>
    %13 = vector.broadcast %2 : vector<1x128xf32> to vector<16x128xf32>
    %14 = arith.addf %12, %13 : vector<16x128xf32>
    %cst_11 = arith.constant 0.000000e+00 : f32
    %15 = vector.broadcast %cst_11 : f32 to vector<16x128xf32>
    %16 = arith.maximumf %14, %15 : vector<16x128xf32>
    %17 = arith.truncf %16 : vector<16x128xf32> to vector<16x128xbf16>
    %c0_12 = arith.constant 0 : index
    %c0_13 = arith.constant 0 : index
    %18 = vector.load %arg4[%c0_12, %c0_13] : memref<128x128xbf16, #tpu.memory_space<vmem>>, vector<128x128xbf16>
    %cst_14 = arith.constant dense<0.000000e+00> : vector<16x128xf32>
    %19 = tpu.matmul %17, %18, %cst_14 {dimension_numbers = #tpu.dot_dimension_numbers<[1], [0], [0], [1], [0, 0, 1, 1], [], []>} : vector<16x128xbf16>, vector<128x128xbf16>, vector<16x128xf32> -> vector<16x128xf32>
    %20 = vector.broadcast %3 : vector<1x128xf32> to vector<16x128xf32>
    %21 = arith.addf %19, %20 : vector<16x128xf32>
    %22 = tpu.iota {dimensions = array<i32: 1>} : vector<16x128xi32>
    %c2_i32 = arith.constant 2 : i32
    %23 = vector.broadcast %c2_i32 : i32 to vector<16x128xi32>
    %24 = arith.cmpi sge, %22, %23 : vector<16x128xi32>
    %c4_i32 = arith.constant 4 : i32
    %25 = vector.broadcast %c4_i32 : i32 to vector<16x128xi32>
    %26 = arith.cmpi slt, %22, %25 : vector<16x128xi32>
    %27 = arith.andi %24, %26 : vector<16x128xi1>
    %cst_15 = arith.constant -2.000000e+01 : f32
    %cst_16 = arith.constant 2.000000e+00 : f32
    %28 = vector.broadcast %cst_15 : f32 to vector<16x128xf32>
    %29 = arith.maximumf %28, %21 : vector<16x128xf32>
    %30 = vector.broadcast %cst_16 : f32 to vector<16x128xf32>
    %31 = arith.minimumf %30, %29 : vector<16x128xf32>
    %32 = arith.select %27, %31, %21 : vector<16x128xi1>, vector<16x128xf32>
    %c0_17 = arith.constant 0 : index
    %c0_18 = arith.constant 0 : index
    %33 = vector.load %arg6[%c0_17, %c0_18] : memref<16x128xf32, #tpu.memory_space<vmem>>, vector<16x128xf32>
    tpu.vector_store %arg6[%c0_17, %c0_18], %32 {strides = array<i32>} : memref<16x128xf32, #tpu.memory_space<vmem>>, vector<16x128xf32>,
    return
  }
  func.func @transform_0(%arg0: i32) -> (i32, i32) {
    %c0_i32 = arith.constant 0 : i32
    %c0_i32_0 = arith.constant 0 : i32
    return %arg0, %c0_i32 : i32, i32
  }
  func.func @transform_1(%arg0: i32) -> (i32, i32) {
    %c0_i32 = arith.constant 0 : i32
    %c0_i32_0 = arith.constant 0 : i32
    %c0_i32_1 = arith.constant 0 : i32
    return %c0_i32, %c0_i32_0 : i32, i32
  }
  func.func @transform_2(%arg0: i32) -> (i32, i32) {
    %c0_i32 = arith.constant 0 : i32
    %c0_i32_0 = arith.constant 0 : i32
    %c0_i32_1 = arith.constant 0 : i32
    return %c0_i32, %c0_i32_0 : i32, i32
  }
  func.func @transform_3(%arg0: i32) -> (i32, i32) {
    %c0_i32 = arith.constant 0 : i32
    %c0_i32_0 = arith.constant 0 : i32
    %c0_i32_1 = arith.constant 0 : i32
    return %c0_i32, %c0_i32_0 : i32, i32
  }
  func.func @transform_4(%arg0: i32) -> (i32, i32) {
    %c0_i32 = arith.constant 0 : i32
    %c0_i32_0 = arith.constant 0 : i32
    %c0_i32_1 = arith.constant 0 : i32
    return %c0_i32, %c0_i32_0 : i32, i32
  }
  func.func @transform_5(%arg0: i32) -> (i32, i32) {
    %c0_i32 = arith.constant 0 : i32
    %c0_i32_0 = arith.constant 0 : i32
    return %arg0, %c0_i32 : i32, i32
  }
}

</mosaic_0001>

<llo_original>
// kernel: tpu_custom_call.1
$region0: #{tpu_custom_call.1}
  #allocation0 [shape = 'u32[]', space=smem, size = 0x4, offset = 0x4, fixed_abs, tag = 'smem constant byte address 0x4 - core index']
  #allocation1 [shape = 'u32[72,128]{1,0:T(1,128)}', space=vmem, size = 0x9000, scoped, tag = 'internal scratch']
  %s0 = inlined_call_operand.hbm [shape: bf16[16,32], index: 0, kind: input, shape index: {}]
  %s1 = inlined_call_operand.hbm [shape: bf16[32,128], index: 1, kind: input, shape index: {}]
  %s2 = inlined_call_operand.hbm [shape: bf16[128,128], index: 2, kind: input, shape index: {}]
  %s3 = inlined_call_operand.hbm [shape: bf16[128,128], index: 3, kind: input, shape index: {}]
  %s4 = inlined_call_operand.hbm [shape: f32[3,128], index: 4, kind: input, shape index: {}]
  %s5 = inlined_call_operand.hbm [shape: f32[16,128], index: 5, kind: output, shape index: {}]
  %s6 = sld [smem:[#allocation0]]
  $region50: #{tpu_custom_call.1} parent=0
    _
  %s8 = ssub.s32 1, %s6
  %s9 = scalar_select 0, %s8, %s6
  $region1: #{tpu_custom_call.1} parent=0
    #allocation2 [shape = 'u8[4096]{0}', space=vmem, size = 0x1000, scoped, tag = 'input window, operand 0, single buffered']
    #allocation3 [shape = 's32[1]{0}', space=sflag, size = 0x4, scoped, tag = 'scoped memory for tpu_custom_call.1']
    #allocation4 [shape = 's32[1]{0}', space=sflag, size = 0x4, scoped, tag = 'scoped memory for tpu_custom_call.1']
    #allocation5 [shape = 'u8[8192]{0}', space=vmem, size = 0x2000, scoped, tag = 'input window, operand 1, single buffered']
    #allocation6 [shape = 's32[1]{0}', space=sflag, size = 0x4, scoped, tag = 'scoped memory for tpu_custom_call.1']
    #allocation7 [shape = 'u8[32768]{0}', space=vmem, size = 0x8000, scoped, tag = 'input window, operand 2, single buffered']
    #allocation8 [shape = 'u8[32768]{0}', space=vmem, size = 0x8000, scoped, tag = 'input window, operand 3, single buffered']
    #allocation9 [shape = 's32[1]{0}', space=sflag, size = 0x4, scoped, tag = 'scoped memory for tpu_custom_call.1']
    #allocation10 [shape = 'u8[2048]{0}', space=vmem, size = 0x800, scoped, tag = 'input window, operand 4, single buffered']
    #allocation11 [shape = 'u8[8192]{0}', space=vmem, size = 0x2000, scoped, tag = 'output window, operand 0, single buffered']
    %10 = vsyncpa [#allocation3], 0
    %11 = vsyncpa [#allocation6], 0
    %12 = vsyncpa [#allocation9], 0
    %13 = vsyncpa [#allocation4], 0
    // Predicated region
    $region2: #{tpu_custom_call.1} parent=1 // pred_check
      _
    $region3: #{tpu_custom_call.1} parent=1 // pred_check_branch
      %15 = sbr.rel (0) target = $region5
    $region4: #{tpu_custom_call.1} parent=1 // pred_region
      %17 = vsyncadd [#allocation3], 0
      %s18 = sshll.u32 %s0, 4
      %s19 = int_to_ptr.hbm [resolvable:$true] %s18
      %s20 = sshll.u32 [#allocation2], 4
      %s21 = int_to_ptr.vmem [resolvable:$true] %s20
      %26 = dma.hbm_to_vmem [thread:$0]  %s19, 128, %s21, [#allocation3], 64, 64, 4
    $region5: #{tpu_custom_call.1} parent=1 // pred_fallthru
      _
    // Predicated region
    $region6: #{tpu_custom_call.1} parent=1 // pred_check
      _
    $region7: #{tpu_custom_call.1} parent=1 // pred_check_branch
      %28 = sbr.rel (0) target = $region9
    $region8: #{tpu_custom_call.1} parent=1 // pred_region
      %30 = vsyncadd [#allocation6], 0
      %s31 = sshll.u32 %s1, 4
      %s32 = int_to_ptr.hbm [resolvable:$true] %s31
      %s33 = sshll.u32 [#allocation5], 4
      %s34 = int_to_ptr.vmem [resolvable:$true] %s33
      %39 = dma.hbm_to_vmem [thread:$0]  %s32, 256, %s34, [#allocation6], 64, 64, 4
    $region9: #{tpu_custom_call.1} parent=1 // pred_fallthru
      _
    // Predicated region
    $region10: #{tpu_custom_call.1} parent=1 // pred_check
      _
    $region11: #{tpu_custom_call.1} parent=1 // pred_check_branch
      %41 = sbr.rel (0) target = $region13
    $region12: #{tpu_custom_call.1} parent=1 // pred_region
      %43 = vsyncadd [#allocation6], 0
      %s44 = sshll.u32 %s2, 4
      %s45 = int_to_ptr.hbm [resolvable:$true] %s44
      %s46 = sshll.u32 [#allocation7], 4
      %s47 = int_to_ptr.vmem [resolvable:$true] %s46
      %52 = dma.hbm_to_vmem [thread:$0]  %s45, 1024, %s47, [#allocation6], 64, 64, 4
    $region13: #{tpu_custom_call.1} parent=1 // pred_fallthru
      _
    // Predicated region
    $region14: #{tpu_custom_call.1} parent=1 // pred_check
      _
    $region15: #{tpu_custom_call.1} parent=1 // pred_check_branch
      %54 = sbr.rel (0) target = $region17
    $region16: #{tpu_custom_call.1} parent=1 // pred_region
      %56 = vsyncadd [#allocation9], 0
      %s57 = sshll.u32 %s3, 4
      %s58 = int_to_ptr.hbm [resolvable:$true] %s57
      %s59 = sshll.u32 [#allocation8], 4
      %s60 = int_to_ptr.vmem [resolvable:$true] %s59
      %65 = dma.hbm_to_vmem [thread:$0]  %s58, 1024, %s60, [#allocation9], 64, 64, 4
    $region17: #{tpu_custom_call.1} parent=1 // pred_fallthru
      _
    // Predicated region
    $region18: #{tpu_custom_call.1} parent=1 // pred_check
      _
    $region19: #{tpu_custom_call.1} parent=1 // pred_check_branch
      %67 = sbr.rel (0) target = $region21
    $region20: #{tpu_custom_call.1} parent=1 // pred_region
      %69 = vsyncadd [#allocation9], 0
      %s71 = sshll.u32 %s4, 4
      %s72 = int_to_ptr.hbm [resolvable:$true] %s71
      %s73 = sshll.u32 [#allocation10], 4
      %s74 = int_to_ptr.vmem [resolvable:$true] %s73
      %76 = dma.hbm_to_vmem [thread:$0]  %s72, 64, %s74, [#allocation9]
    $region21: #{tpu_custom_call.1} parent=1 // pred_fallthru
      _
    // Predicated region
    $region22: #{tpu_custom_call.1} parent=1 // pred_check
      _
    $region23: #{tpu_custom_call.1} parent=1 // pred_check_branch
      %78 = sbr.rel (0) target = $region25
    $region24: #{tpu_custom_call.1} parent=1 // pred_region
      %80 = dma.done [#allocation3], 128
    $region25: #{tpu_custom_call.1} parent=1 // pred_fallthru
      _
    // Predicated region
    $region26: #{tpu_custom_call.1} parent=1 // pred_check
      _
    $region27: #{tpu_custom_call.1} parent=1 // pred_check_branch
      %82 = sbr.rel (0) target = $region29
    $region28: #{tpu_custom_call.1} parent=1 // pred_region
      %84 = dma.done [#allocation6], 256
    $region29: #{tpu_custom_call.1} parent=1 // pred_fallthru
      _
    // Predicated region
    $region30: #{tpu_custom_call.1} parent=1 // pred_check
      _
    $region31: #{tpu_custom_call.1} parent=1 // pred_check_branch
      %86 = sbr.rel (0) target = $region33
    $region32: #{tpu_custom_call.1} parent=1 // pred_region
      %88 = dma.done [#allocation6], 1024
    $region33: #{tpu_custom_call.1} parent=1 // pred_fallthru
      _
    // Predicated region
    $region34: #{tpu_custom_call.1} parent=1 // pred_check
      _
    $region35: #{tpu_custom_call.1} parent=1 // pred_check_branch
      %90 = sbr.rel (0) target = $region37
    $region36: #{tpu_custom_call.1} parent=1 // pred_region
      %92 = dma.done [#allocation9], 1024
    $region37: #{tpu_custom_call.1} parent=1 // pred_fallthru
      _
    // Predicated region
    $region38: #{tpu_custom_call.1} parent=1 // pred_check
      _
    $region39: #{tpu_custom_call.1} parent=1 // pred_check_branch
      %94 = sbr.rel (0) target = $region41
    $region40: #{tpu_custom_call.1} parent=1 // pred_region
      %96 = dma.done [#allocation9], 64
    $region41: #{tpu_custom_call.1} parent=1 // pred_fallthru
      _
    %v98 = vld [vmem:[#allocation2] sm:$0xf]
    %v99 = vld [vmem:[#allocation2 + $0x4] sm:$0xf]
    %v100 = vld [vmem:[#allocation10] sm:$0x1]
    %v101 = vld [vmem:[#allocation10 + $0x1] sm:$0x1]
    %v102 = vld [vmem:[#allocation10 + $0x2] sm:$0x1]
    %v103 = vld [vmem:[#allocation5] sm:$0xf]
    %v104 = vld [vmem:[#allocation5 + $0x4] sm:$0xf]
    %v105 = vld [vmem:[#allocation5 + $0x8] sm:$0xf]
    %v106 = vld [vmem:[#allocation5 + $0xc] sm:$0xf]
    %v107 = vperm.slane %v100, 0
    %v110 = vunpack.c.l.b16 %v98
    %v111 = vunpack.c.l.b16 %v99
    %v112 = vpack.c.b16 %v111, %v110
    %v117 = vunpack.c.l.b16 %v103
    %v118 = vunpack.c.l.b16 %v104
    %v119 = vunpack.c.l.b16 %v105
    %v120 = vunpack.c.l.b16 %v106
    %v121 = vpack.c.b16 %v118, %v117
    %v122 = vpack.c.b16 %v120, %v119
    %vm125 = vcmask 261120
    %v127 = vsel %vm125, %v112, 0
    %129 = vmatpush.bf16.msra.mxu0 0
    %130 = vmatpush.bf16.msra.mxu0 0
    %131 = vmatpush.bf16.msra.mxu0 0
    %132 = vmatpush.bf16.msra.mxu0 0
    %133 = vmatpush.bf16.msra.mxu0 0
    %134 = vmatpush.bf16.msra.mxu0 0
    %135 = vmatpush.bf16.msra.mxu0 %v122
    %136 = vmatpush.bf16.msra.mxu0 %v121
    %137 = vmatmul.bf16.gmra.mxu0 %v127
    %v138 = vpop.f32.mrf.mxu0
    %v139 = vadd.f32 %v107, %v138
    %v140 = vpop.f32.mrf.mxu0
    %v141 = vadd.f32 %v107, %v140
    %142 = vdwg.mxu0
    %v143 = vmax.f32 %v139, 0.0
    %v144 = vmax.f32 %v141, 0.0
    %v145 = vpack.c.bf16 %v144, %v143
    %v146 = vld [vmem:[#allocation7] sm:$0xf]
    %v147 = vld [vmem:[#allocation7 + $0x4] sm:$0xf]
    %v148 = vld [vmem:[#allocation7 + $0x8] sm:$0xf]
    %v149 = vld [vmem:[#allocation7 + $0xc] sm:$0xf]
    %v150 = vld [vmem:[#allocation7 + $0x10] sm:$0xf]
    %v151 = vld [vmem:[#allocation7 + $0x14] sm:$0xf]
    %v152 = vld [vmem:[#allocation7 + $0x18] sm:$0xf]
    %v153 = vld [vmem:[#allocation7 + $0x1c] sm:$0xf]
    %v154 = vld [vmem:[#allocation7 + $0x20] sm:$0xf]
    %v155 = vld [vmem:[#allocation7 + $0x24] sm:$0xf]
    %v156 = vld [vmem:[#allocation7 + $0x28] sm:$0xf]
    %v157 = vld [vmem:[#allocation7 + $0x2c] sm:$0xf]
    %v158 = vld [vmem:[#allocation7 + $0x30] sm:$0xf]
    %v159 = vld [vmem:[#allocation7 + $0x34] sm:$0xf]
    %v160 = vld [vmem:[#allocation7 + $0x38] sm:$0xf]
    %v161 = vld [vmem:[#allocation7 + $0x3c] sm:$0xf]
    %v162 = vperm.slane %v101, 0
    %v179 = vunpack.c.l.b16 %v146
    %v180 = vunpack.c.l.b16 %v147
    %v181 = vunpack.c.l.b16 %v148
    %v182 = vunpack.c.l.b16 %v149
    %v183 = vunpack.c.l.b16 %v150
    %v184 = vunpack.c.l.b16 %v151
    %v185 = vunpack.c.l.b16 %v152
    %v186 = vunpack.c.l.b16 %v153
    %v187 = vunpack.c.l.b16 %v154
    %v188 = vunpack.c.l.b16 %v155
    %v189 = vunpack.c.l.b16 %v156
    %v190 = vunpack.c.l.b16 %v157
    %v191 = vunpack.c.l.b16 %v158
    %v192 = vunpack.c.l.b16 %v159
    %v193 = vunpack.c.l.b16 %v160
    %v194 = vunpack.c.l.b16 %v161
    %v195 = vpack.c.b16 %v180, %v179
    %v196 = vpack.c.b16 %v182, %v181
    %v197 = vpack.c.b16 %v184, %v183
    %v198 = vpack.c.b16 %v186, %v185
    %v199 = vpack.c.b16 %v188, %v187
    %v200 = vpack.c.b16 %v190, %v189
    %v201 = vpack.c.b16 %v192, %v191
    %v202 = vpack.c.b16 %v194, %v193
    %211 = vmatpush.bf16.msra.mxu0 %v202
    %212 = vmatpush.bf16.msra.mxu0 %v201
    %213 = vmatpush.bf16.msra.mxu0 %v200
    %214 = vmatpush.bf16.msra.mxu0 %v199
    %215 = vmatpush.bf16.msra.mxu0 %v198
    %216 = vmatpush.bf16.msra.mxu0 %v197
    %217 = vmatpush.bf16.msra.mxu0 %v196
    %218 = vmatpush.bf16.msra.mxu0 %v195
    %219 = vmatmul.bf16.gmra.mxu0 %v145
    %v220 = vpop.f32.mrf.mxu0
    %v221 = vadd.f32 %v162, %v220
    %v222 = vpop.f32.mrf.mxu0
    %v223 = vadd.f32 %v162, %v222
    %224 = vdwg.mxu0
    %v225 = vmax.f32 %v221, 0.0
    %v226 = vmax.f32 %v223, 0.0
    %v227 = vpack.c.bf16 %v226, %v225
    %v228 = vld [vmem:[#allocation8] sm:$0xf]
    %v229 = vld [vmem:[#allocation8 + $0x4] sm:$0xf]
    %v230 = vld [vmem:[#allocation8 + $0x8] sm:$0xf]
    %v231 = vld [vmem:[#allocation8 + $0xc] sm:$0xf]
    %v232 = vld [vmem:[#allocation8 + $0x10] sm:$0xf]
    %v233 = vld [vmem:[#allocation8 + $0x14] sm:$0xf]
    %v234 = vld [vmem:[#allocation8 + $0x18] sm:$0xf]
    %v235 = vld [vmem:[#allocation8 + $0x1c] sm:$0xf]
    %v236 = vld [vmem:[#allocation8 + $0x20] sm:$0xf]
    %v237 = vld [vmem:[#allocation8 + $0x24] sm:$0xf]
    %v238 = vld [vmem:[#allocation8 + $0x28] sm:$0xf]
    %v239 = vld [vmem:[#allocation8 + $0x2c] sm:$0xf]
    %v240 = vld [vmem:[#allocation8 + $0x30] sm:$0xf]
    %v241 = vld [vmem:[#allocation8 + $0x34] sm:$0xf]
    %v242 = vld [vmem:[#allocation8 + $0x38] sm:$0xf]
    %v243 = vld [vmem:[#allocation8 + $0x3c] sm:$0xf]
    %v244 = vperm.slane %v102, 0
    %v261 = vunpack.c.l.b16 %v228
    %v262 = vunpack.c.l.b16 %v229
    %v263 = vunpack.c.l.b16 %v230
    %v264 = vunpack.c.l.b16 %v231
    %v265 = vunpack.c.l.b16 %v232
    %v266 = vunpack.c.l.b16 %v233
    %v267 = vunpack.c.l.b16 %v234
    %v268 = vunpack.c.l.b16 %v235
    %v269 = vunpack.c.l.b16 %v236
    %v270 = vunpack.c.l.b16 %v237
    %v271 = vunpack.c.l.b16 %v238
    %v272 = vunpack.c.l.b16 %v239
    %v273 = vunpack.c.l.b16 %v240
    %v274 = vunpack.c.l.b16 %v241
    %v275 = vunpack.c.l.b16 %v242
    %v276 = vunpack.c.l.b16 %v243
    %v277 = vpack.c.b16 %v262, %v261
    %v278 = vpack.c.b16 %v264, %v263
    %v279 = vpack.c.b16 %v266, %v265
    %v280 = vpack.c.b16 %v268, %v267
    %v281 = vpack.c.b16 %v270, %v269
    %v282 = vpack.c.b16 %v272, %v271
    %v283 = vpack.c.b16 %v274, %v273
    %v284 = vpack.c.b16 %v276, %v275
    %293 = vmatpush.bf16.msra.mxu0 %v284
    %294 = vmatpush.bf16.msra.mxu0 %v283
    %295 = vmatpush.bf16.msra.mxu0 %v282
    %296 = vmatpush.bf16.msra.mxu0 %v281
    %297 = vmatpush.bf16.msra.mxu0 %v280
    %298 = vmatpush.bf16.msra.mxu0 %v279
    %299 = vmatpush.bf16.msra.mxu0 %v278
    %300 = vmatpush.bf16.msra.mxu0 %v277
    %301 = vmatmul.bf16.gmra.mxu0 %v227
    %v302 = vpop.f32.mrf.mxu0
    %v303 = vadd.f32 %v244, %v302
    %v304 = vpop.f32.mrf.mxu0
    %v305 = vadd.f32 %v244, %v304
    %306 = vdwg.mxu0
    %v307 = vlaneseq
    %v308 = vand.u32 %v307, 127
    %vm309 = vcmp.ge.s32.totalorder %v308, 2
    %vm310 = vcmp.lt.s32.totalorder %v308, 4
    %vm311 = vmand %vm309, %vm310
    %v312 = vmax.f32 %v303, -20.0
    %v313 = vmax.f32 %v305, -20.0
    %v314 = vmin.f32 %v312, 2.0
    %v315 = vmin.f32 %v313, 2.0
    %v316 = vsel %vm311, %v314, %v303
    %v317 = vsel %vm311, %v315, %v305
    %318 = vst [vmem:[#allocation11] sm:$0xff] %v316
    %319 = vst [vmem:[#allocation11 + $0x8] sm:$0xff] %v317
    // Predicated region
    $region42: #{tpu_custom_call.1} parent=1 // pred_check
      _
    $region43: #{tpu_custom_call.1} parent=1 // pred_check_branch
      %321 = sbr.rel (0) target = $region45
    $region44: #{tpu_custom_call.1} parent=1 // pred_region
      %323 = vsyncadd [#allocation4], 0
      %s324 = sshll.u32 [#allocation11], 4
      %s325 = int_to_ptr.vmem [resolvable:$true] %s324
      %s326 = sshll.u32 %s5, 4
      %s327 = int_to_ptr.hbm [resolvable:$true] %s326
      %332 = dma.vmem_to_hbm [thread:$0]  %s325, 256, %s327, [#allocation4], 128, 128, 8
    $region45: #{tpu_custom_call.1} parent=1 // pred_fallthru
      _
    // Predicated region
    $region46: #{tpu_custom_call.1} parent=1 // pred_check
      _
    $region47: #{tpu_custom_call.1} parent=1 // pred_check_branch
      %334 = sbr.rel (0) target = $region49
    $region48: #{tpu_custom_call.1} parent=1 // pred_region
      %336 = dma.done [#allocation4], 256
    $region49: #{tpu_custom_call.1} parent=1 // pred_fallthru
      _
    %337 = vsyncpa [#allocation3], 1
    %338 = vsyncpa [#allocation6], 1
    %339 = vsyncpa [#allocation9], 1
    %340 = vsyncpa [#allocation4], 1

</llo_original>
